<compile_context>
chip_gen: v6e
topology: v6e:2x2x1
jax: 0.10.0
libtpu: 0.0.40
codegen_flags: <defaults>
</compile_context>

<pallas_src>
import functools
import math

import jax
import jax.numpy as jnp
from jax import lax
from jax.experimental import pallas as pl
from jax.experimental.pallas import tpu as pltpu


_LANE = 128          # feature dims padded to lane width (multiple of 128)
_NODE_ALIGN = 256    # node dim padded to this; divides every tile choice below


def _round_up(v, m):
    return ((v + m - 1) // m) * m


def _pad2(a, rows, cols):
    r, c = a.shape
    if r == rows and c == cols:
        return a
    return jnp.pad(a, ((0, rows - r), (0, cols - c)))


def _tpu_config(tile_m=None, tile_k=None):
    """Generation-dependent VMEM budget and tile preferences."""
    vmem_phys = 64 * 1024 * 1024            # conservative default (v7x-sized VMEM)
    try:
        info = pltpu.get_tpu_info()
        vmem_phys = int(getattr(info, "vmem_capacity_bytes", vmem_phys))
    except Exception:
        pass
    if vmem_phys >= 96 * 1024 * 1024:       # v5e / v6e: 128 MiB physical VMEM
        vmem_limit, tm, tk = 80 * 1024 * 1024, 512, 1024
    else:                                   # v7x: 64 MiB physical VMEM
        vmem_limit, tm, tk = 40 * 1024 * 1024, 256, 512
    if tile_m is not None:
        tm = tile_m
    if tile_k is not None:
        tk = tile_k
    return vmem_limit, tm, tk


def _pick_tile(n_pad, pref):
    """Largest power-of-two tile <= pref that divides n_pad (n_pad % 256 == 0)."""
    t = min(pref, n_pad)
    while t > _NODE_ALIGN and n_pad % t != 0:
        t //= 2
    if n_pad % t != 0:
        t = _NODE_ALIGN
    return t


# --------------------------------------------------------------------------------------
# Kernels
# --------------------------------------------------------------------------------------
def _support_kernel(*refs, use_bias, withloop, fo_pad):
    """[support | self] = X_i @ [W | W_self] (+ [bias | 0]).

    refs: x, w_combined, [bias_combined], support_out, [self_out]
    """
    x_ref, w_ref = refs[0], refs[1]
    idx = 2
    b_ref = None
    if use_bias:
        b_ref = refs[idx]
        idx += 1
    sup_ref = refs[idx]
    idx += 1
    self_ref = refs[idx] if withloop else None

    s = jnp.dot(x_ref[...], w_ref[...], preferred_element_type=jnp.float32)
    if use_bias:
        s = s + b_ref[...]                      # (1, width) broadcasts over rows
    sup_ref[...] = s[:, :fo_pad].astype(sup_ref.dtype)   # bf16 for downstream MXU
    if withloop:
        self_ref[...] = s[:, fo_pad:].astype(self_ref.dtype)  # f32, added in stage 2


def _agg_small_kernel(*refs, withloop, fused_relu, fused_res):
    """Small-graph path: out_i = G_i @ support (+ self_i), relu, residual, store.

    refs: g_row (tm, n_pad), support (n_pad, fo), [self_row], [x_row], out
    """
    g_ref, s_ref = refs[0], refs[1]
    idx = 2
    self_ref = x_ref = None
    if withloop:
        self_ref = refs[idx]
        idx += 1
    if fused_res:
        x_ref = refs[idx]
        idx += 1
    o_ref = refs[idx]

    out = jnp.dot(g_ref[...], s_ref[...], preferred_element_type=jnp.float32)
    if withloop:
        out = out + self_ref[...]
    if fused_relu:
        out = jnp.maximum(out, 0.0)
    if fused_res:
        out = out + x_ref[...].astype(jnp.float32)
    o_ref[...] = out.astype(o_ref.dtype)


def _agg_kernel(*refs, withloop, fused_relu, fused_res, support_resident, tk):
    """Large-graph path: acc_i (init from self_i at k==0) += G_ik @ support_k; finalize.

    refs: g, support, [self_row], [x_row], out, acc(scratch)
    """
    g_ref, s_ref = refs[0], refs[1]
    idx = 2
    self_ref = x_ref = None
    if withloop:
        self_ref = refs[idx]
        idx += 1
    if fused_res:
        x_ref = refs[idx]
        idx += 1
    o_ref, acc_ref = refs[idx], refs[idx + 1]

    k = pl.program_id(1)

    @pl.when(k == 0)
    def _():
        if withloop:
            acc_ref[...] = self_ref[...]          # self-loop precomputed in stage 1 (f32)
        else:
            acc_ref[...] = jnp.zeros_like(acc_ref)

    if support_resident:
        start = pl.multiple_of(k * tk, tk)
        s_blk = s_ref[pl.ds(start, tk), :]        # slice the resident support array
    else:
        s_blk = s_ref[...]
    acc_ref[...] += jnp.dot(g_ref[...], s_blk, preferred_element_type=jnp.float32)

    @pl.when(k == pl.num_programs(1) - 1)
    def _():
        out = acc_ref[...]
        if fused_relu:
            out = jnp.maximum(out, 0.0)
        if fused_res:
            out = out + x_ref[...].astype(jnp.float32)
        o_ref[...] = out.astype(o_ref.dtype)


# --------------------------------------------------------------------------------------
# Padded layer (operates on already-padded bf16 X and G)
# --------------------------------------------------------------------------------------
def _hgraph_conv_padded(x_p, g_p, weight, bias, self_weight, *, res, activation,
                        fuse_tail, out_dtype, cfg,
                        force_path=None, force_support_resident=None):
    vmem_limit, tm_pref, tk_pref = cfg
    n_pad, fi_pad = x_p.shape
    assert g_p.shape == (n_pad, n_pad) and g_p.dtype == jnp.bfloat16
    F_in, F_out = weight.shape
    fo_pad = _round_up(F_out, _LANE)
    withloop = self_weight is not None
    use_bias = bias is not None
    fused_relu = fuse_tail and activation == "relu"
    fused_res = fuse_tail and res

    # ---- stage 1: combined support (+ self-loop) ---------------------------------------
    w_p = _pad2(weight.astype(jnp.float32), fi_pad, fo_pad)
    if withloop:
        ws_p = _pad2(self_weight.astype(jnp.float32), fi_pad, fo_pad)
        w_c = jnp.concatenate([w_p, ws_p], axis=1)
    else:
        w_c = w_p
    w_c = w_c.astype(jnp.bfloat16)
    w_cols = w_c.shape[1]

    tm1 = _pick_tile(n_pad, tm_pref)
    s1_inputs = [x_p, w_c]
    s1_specs = [pl.BlockSpec((tm1, fi_pad), lambda i: (i, 0)),
                pl.BlockSpec((fi_pad, w_cols), lambda i: (0, 0))]
    if use_bias:
        b_p = _pad2(jnp.reshape(bias.astype(jnp.float32), (1, F_out)), 1, fo_pad)
        if withloop:
            b_p = jnp.concatenate([b_p, jnp.zeros((1, fo_pad), jnp.float32)], axis=1)
        s1_inputs.append(b_p)
        s1_specs.append(pl.BlockSpec((1, w_cols), lambda i: (0, 0)))

    s1_out_shapes = [jax.ShapeDtypeStruct((n_pad, fo_pad), jnp.bfloat16)]
    s1_out_specs = [pl.BlockSpec((tm1, fo_pad), lambda i: (i, 0))]
    if withloop:
        s1_out_shapes.append(jax.ShapeDtypeStruct((n_pad, fo_pad), jnp.float32))
        s1_out_specs.append(pl.BlockSpec((tm1, fo_pad), lambda i: (i, 0)))

    s1_out = pl.pallas_call(
        functools.partial(_support_kernel, use_bias=use_bias, withloop=withloop,
                          fo_pad=fo_pad),
        out_shape=s1_out_shapes,
        grid=(n_pad // tm1,),
        in_specs=s1_specs,
        out_specs=s1_out_specs,
        compiler_params=pltpu.CompilerParams(
            dimension_semantics=("parallel",),
            vmem_limit_bytes=vmem_limit),
    )(*s1_inputs)
    support = s1_out[0]
    self_out = s1_out[1] if withloop else None

    # ---- stage 2: path selection --------------------------------------------------------
    tm_small = _NODE_ALIGN
    small_bytes = (2 * tm_small * n_pad * 2        # double-buffered G row blocks (bf16)
                   + 2 * n_pad * fo_pad * 2        # resident support (allow 2 copies)
                   + 4 * tm_small * fo_pad * 8)    # self / x / out blocks + headroom
    small = small_bytes <= vmem_limit // 2
    if force_path == "small":
        small = True
    elif force_path == "large":
        small = False

    if small:
        # -- no reduction axis: full G row block + resident support -----------------------
        in_arrays = [g_p, support]
        in_specs = [pl.BlockSpec((tm_small, n_pad), lambda i: (i, 0)),
                    pl.BlockSpec((n_pad, fo_pad), lambda i: (0, 0))]
        if withloop:
            in_arrays.append(self_out)
            in_specs.append(pl.BlockSpec((tm_small, fo_pad), lambda i: (i, 0)))
        if fused_res:
            in_arrays.append(x_p)
            in_specs.append(pl.BlockSpec((tm_small, fi_pad), lambda i: (i, 0)))
        return pl.pallas_call(
            functools.partial(_agg_small_kernel, withloop=withloop,
                              fused_relu=fused_relu, fused_res=fused_res),
            out_shape=jax.ShapeDtypeStruct((n_pad, fo_pad), out_dtype),
            grid=(n_pad // tm_small,),
            in_specs=in_specs,
            out_specs=pl.BlockSpec((tm_small, fo_pad), lambda i: (i, 0)),
            compiler_params=pltpu.CompilerParams(
                dimension_semantics=("parallel",),
                vmem_limit_bytes=vmem_limit),
        )(*in_arrays)

    # -- (i, k) grid, f32 accumulator, reduction axis last ---------------------------------
    tm = _pick_tile(n_pad, tm_pref)
    tk = _pick_tile(n_pad, tk_pref)
    support_resident = (n_pad * fo_pad * 2) <= vmem_limit // 4
    if force_support_resident is not None:
        support_resident = force_support_resident

    in_arrays = [g_p, support]
    in_specs = [pl.BlockSpec((tm, tk), lambda i, k: (i, k))]
    if support_resident:
        in_specs.append(pl.BlockSpec((n_pad, fo_pad), lambda i, k: (0, 0)))
    else:
        in_specs.append(pl.BlockSpec((tk, fo_pad), lambda i, k: (k, 0)))
    if withloop:
        in_arrays.append(self_out)
        in_specs.append(pl.BlockSpec((tm, fo_pad), lambda i, k: (i, 0)))
    if fused_res:
        in_arrays.append(x_p)
        in_specs.append(pl.BlockSpec((tm, fi_pad), lambda i, k: (i, 0)))

    return pl.pallas_call(
        functools.partial(_agg_kernel, withloop=withloop, fused_relu=fused_relu,
                          fused_res=fused_res, support_resident=support_resident, tk=tk),
        out_shape=jax.ShapeDtypeStruct((n_pad, fo_pad), out_dtype),
        grid=(n_pad // tm, n_pad // tk),
        in_specs=in_specs,
        out_specs=pl.BlockSpec((tm, fo_pad), lambda i, k: (i, 0)),
        scratch_shapes=[pltpu.VMEM((tm, fo_pad), jnp.float32)],
        compiler_params=pltpu.CompilerParams(
            dimension_semantics=("parallel", "arbitrary"),
            vmem_limit_bytes=vmem_limit),
    )(*in_arrays)


# --------------------------------------------------------------------------------------
# HGraphConvolutionBS.forward
# --------------------------------------------------------------------------------------
def hgraph_conv_bs(x, G, weight, bias=None, self_weight=None, bn=None, *,
                   res=False, activation="identity",
                   tile_m=None, tile_k=None,
                   force_path=None, force_support_resident=None):
    cfg = _tpu_config(tile_m, tile_k)
    N, F_in = x.shape
    F_out = weight.shape[1]
    if res and F_in != F_out:
        raise ValueError(
            f"res=True requires in_features == out_features, got {F_in} vs {F_out}")
    n_pad = _round_up(N, _NODE_ALIGN)
    fi_pad = _round_up(F_in, _LANE)
    x_p = _pad2(x.astype(jnp.float32), n_pad, fi_pad).astype(jnp.bfloat16)
    g_p = _pad2(G.astype(jnp.float32), n_pad, n_pad).astype(jnp.bfloat16)
    withbn = bn is not None

    out_p = _hgraph_conv_padded(
        x_p, g_p, weight, bias, self_weight,
        res=res, activation=activation, fuse_tail=not withbn,
        out_dtype=jnp.float32, cfg=cfg,
        force_path=force_path, force_support_resident=force_support_resident)
    out = out_p[:N, :F_out]

    if withbn:
        # TODO(synk): BatchNorm1d is modelled with training-mode batch statistics only;
        # eval-mode running statistics are not implemented.
        mean = jnp.mean(out, axis=0)
        var = jnp.var(out, axis=0)
        out = (out - mean) * lax.rsqrt(var + bn["eps"]) * bn["gamma"] + bn["beta"]
        if activation == "relu":
            out = jnp.maximum(out, 0.0)
        if res:
            out = out + x_p[:N, :F_out].astype(jnp.float32)   # bf16 copy of x (see header)
    return out


# --------------------------------------------------------------------------------------
# MultiLayerHGCN.forward (aggrmethod='nores', dense=False -> output is last layer's x)
# --------------------------------------------------------------------------------------
def init_layer_params(key, in_f, out_f, *, withloop=False, use_bias=True, withbn=False):
    """Mirror HGraphConvolutionBS.reset_parameters(): U(-stdv, stdv), stdv = 1/sqrt(out)."""
    kw, ks, kb = jax.random.split(key, 3)
    stdv = 1.0 / math.sqrt(out_f)
    return {
        "weight": jax.random.uniform(kw, (in_f, out_f), jnp.float32, -stdv, stdv),
        "self_weight": (jax.random.uniform(ks, (in_f, out_f), jnp.float32, -stdv, stdv)
                        if withloop else None),
        "bias": (jax.random.uniform(kb, (out_f,), jnp.float32, -stdv, stdv)
                 if use_bias else None),
        "bn": ({"gamma": jnp.ones((out_f,), jnp.float32),
                "beta": jnp.zeros((out_f,), jnp.float32),
                "eps": 1e-5} if withbn else None),
    }


def multi_layer_hgcn(x, G, layer_params, *, res=False, dropout=0.5,
                     training=False, rng=None, tile_m=None, tile_k=None):
    """ReLU between hidden layers, identity on the last; dropout only when training.

    Activations stay padded (n_pad x f_pad, bf16) between layers; G is padded/cast once.
    """
    # TODO(synk): cross-pallas_call weight prefetch (P10) is not implemented.
    cfg = _tpu_config(tile_m, tile_k)
    n_layers = len(layer_params)
    if n_layers == 0:
        return x
    N, F0 = x.shape
    n_pad = _round_up(N, _NODE_ALIGN)
    g_p = _pad2(G.astype(jnp.float32), n_pad, n_pad).astype(jnp.bfloat16)
    h = _pad2(x.astype(jnp.float32), n_pad, _round_up(F0, _LANE)).astype(jnp.bfloat16)
    if training and rng is None:
        rng = jax.random.PRNGKey(0)

    for i, p in enumerate(layer_params):
        last = i == n_layers - 1
        act = "identity" if last else "relu"
        F_in, F_out = p["weight"].shape
        if res and F_in != F_out:
            raise ValueError("res=True requires in_features == out_features")
        withbn = p["bn"] is not None
        out_dtype = jnp.float32 if (last or withbn) else jnp.bfloat16

        out_p = _hgraph_conv_padded(
            h, g_p, p["weight"], p["bias"], p["self_weight"],
            res=res, activation=act, fuse_tail=not withbn,
            out_dtype=out_dtype, cfg=cfg)

        if withbn:
            out = out_p[:N, :F_out]
            bn = p["bn"]
            mean = jnp.mean(out, axis=0)
            var = jnp.var(out, axis=0)
            out = (out - mean) * lax.rsqrt(var + bn["eps"]) * bn["gamma"] + bn["beta"]
            if act == "relu":
                out = jnp.maximum(out, 0.0)
            if res:
                out = out + h[:N, :F_out].astype(jnp.float32)
            if last:
                return out
            h = _pad2(out, n_pad, _round_up(F_out, _LANE)).astype(jnp.bfloat16)
        else:
            if last:
                return out_p[:N, :F_out]
            h = out_p                                        # stays padded, bf16

        if training:
            rng, sub = jax.random.split(rng)
            keep = 1.0 - dropout
            mask = jax.random.bernoulli(sub, keep, h.shape)
            h = jnp.where(mask, h / keep, jnp.zeros_like(h)).astype(jnp.bfloat16)
    return None


# --------------------------------------------------------------------------------------
# Pure-JAX references (mirroring the bf16 rounding done by the kernels)
# --------------------------------------------------------------------------------------
def _bf16(a):
    return a.astype(jnp.bfloat16).astype(jnp.float32)


def _mm(a, b):
    return jnp.dot(a, b, precision=lax.Precision.HIGHEST)


def _reference_layer(x, G, weight, bias, self_weight, bn, *, res, activation,
                     round_output=False):
    xb = _bf16(x)
    gb = _bf16(G)
    support = _mm(xb, _bf16(weight))
    if bias is not None:
        support = support + bias
    support = _bf16(support)
    out = _mm(gb, support)
    if self_weight is not None:
        out = out + _mm(xb, _bf16(self_weight))
    if bn is not None:
        mean = jnp.mean(out, axis=0)
        var = jnp.var(out, axis=0)
        out = (out - mean) / jnp.sqrt(var + bn["eps"]) * bn["gamma"] + bn["beta"]
    if activation == "relu":
        out = jnp.maximum(out, 0.0)
    if res:
        out = out + xb
    if round_output:
        out = _bf16(out)
    return out


def _reference_multilayer(x, G, layer_params, *, res):
    n_layers = len(layer_params)
    h = x
    for i, p in enumerate(layer_params):
        last = i == n_layers - 1
        act = "identity" if last else "relu"
        h = _reference_layer(h, G, p["weight"], p["bias"], p["self_weight"], p["bn"],
                             res=res, activation=act, round_output=not last)
    return h


# --------------------------------------------------------------------------------------
if __name__ == "__main__":
    key = jax.random.PRNGKey(0)
    k_x, k_g, k_l1, k_l2, k_m = jax.random.split(key, 5)

    # Graph: N nodes, dense row-normalized hypergraph propagation matrix G.
    N = 512
    G_raw = jax.random.uniform(k_g, (N, N), jnp.float32)
    G = G_raw / jnp.sum(G_raw, axis=1, keepdims=True)

    tol = dict(atol=1e-2, rtol=1e-2)

    # --- Test 1: single layer, withloop + bias + res + ReLU, no BN (small fast path) ----
    F = 64
    x1 = jax.random.normal(k_x, (N, F), jnp.float32)
    p1 = init_layer_params(k_l1, F, F, withloop=True, use_bias=True, withbn=False)
    out1 = jax.block_until_ready(
        hgraph_conv_bs(x1, G, p1["weight"], p1["bias"], p1["self_weight"], p1["bn"],
                       res=True, activation="relu"))
    ref1 = _reference_layer(x1, G, p1["weight"], p1["bias"], p1["self_weight"], p1["bn"],
                            res=True, activation="relu")
    assert out1.shape == (N, F)
    assert jnp.allclose(out1, ref1, **tol), float(jnp.max(jnp.abs(out1 - ref1)))

    # --- Test 2: single layer with BatchNorm (training-mode batch stats) ----------------
    p2 = init_layer_params(k_l2, F, 32, withloop=False, use_bias=True, withbn=True)
    out2 = jax.block_until_ready(
        hgraph_conv_bs(x1, G, p2["weight"], p2["bias"], p2["self_weight"], p2["bn"],
                       res=False, activation="relu"))
    ref2 = _reference_layer(x1, G, p2["weight"], p2["bias"], p2["self_weight"], p2["bn"],
                            res=False, activation="relu")
    assert out2.shape == (N, 32)
    assert jnp.allclose(out2, ref2, **tol), float(jnp.max(jnp.abs(out2 - ref2)))

    # --- Test 3: forced large (i, k) path, resident support, self-loop init at k==0 -----
    out3 = jax.block_until_ready(
        hgraph_conv_bs(x1, G, p1["weight"], p1["bias"], p1["self_weight"], p1["bn"],
                       res=True, activation="relu",
                       tile_m=256, tile_k=256, force_path="large",
                       force_support_resident=True))
    assert jnp.allclose(out3, ref1, **tol), float(jnp.max(jnp.abs(out3 - ref1)))

    # --- Test 4: forced large path, streamed support blocks -----------------------------
    out4 = jax.block_until_ready(
        hgraph_conv_bs(x1, G, p2["weight"], p2["bias"], None, None,
                       res=False, activation="relu",
                       tile_m=256, tile_k=256, force_path="large",
                       force_support_resident=False))
    ref4 = _reference_layer(x1, G, p2["weight"], p2["bias"], None, None,
                            res=False, activation="relu")
    assert jnp.allclose(out4, ref4, **tol), float(jnp.max(jnp.abs(out4 - ref4)))

    # --- Test 5: MultiLayerHGCN (32 -> 64 -> 64 -> 16), eval mode (no dropout) ----------
    in_features, hidden, out_dim, nbaselayer = 32, 64, 16, 3
    km_x, *km_layers = jax.random.split(k_m, nbaselayer + 1)
    xm = jax.random.normal(km_x, (N, in_features), jnp.float32)
    dims = [in_features] + [hidden] * (nbaselayer - 1) + [out_dim]
    # Faithful to MultiLayerHGCN.__makehidden: bias=True, withloop is not forwarded
    # (no self_weight); the BN path is exercised in test 2.
    layers = [init_layer_params(km_layers[i], dims[i], dims[i + 1],
                                withloop=False, use_bias=True, withbn=False)
              for i in range(nbaselayer)]
    out5 = jax.block_until_ready(
        multi_layer_hgcn(xm, G, layers, res=False, training=False))
    ref5 = _reference_multilayer(xm, G, layers, res=False)
    assert out5.shape == (N, out_dim)
    assert jnp.allclose(out5, ref5, **tol), float(jnp.max(jnp.abs(out5 - ref5)))

    print("KERNEL_OK")
</pallas_src>

<mosaic_0001>
module attributes {stable_mosaic.version = 11 : i64} {
  func.func @_support_kernel(%arg0: i32, %arg1: memref<256x128xbf16, #tpu.memory_space<vmem>>, %arg2: memref<128x256xbf16, #tpu.memory_space<vmem>>, %arg3: memref<1x256xf32, #tpu.memory_space<vmem>>, %arg4: memref<256x128xbf16, #tpu.memory_space<vmem>>, %arg5: memref<256x128xf32, #tpu.memory_space<vmem>>) attributes {dimension_semantics = [#tpu.dimension_semantics<parallel>], iteration_bounds = array<i64: 2>, scalar_prefetch = 0 : i64, scratch_operands = 0 : i64, tpu.core_type = #tpu.core_type<tc>, window_params = [{transform_indices = @transform_0, window_bounds = array<i64: 256, 128>}, {pipeline_mode = #tpu.pipeline_mode<synchronous>, transform_indices = @transform_1, window_bounds = array<i64: 128, 256>}, {pipeline_mode = #tpu.pipeline_mode<synchronous>, transform_indices = @transform_2, window_bounds = array<i64: 1, 256>}, {transform_indices = @transform_3, window_bounds = array<i64: 256, 128>}, {transform_indices = @transform_4, window_bounds = array<i64: 256, 128>}]} {
    %c0 = arith.constant 0 : index
    %c0_0 = arith.constant 0 : index
    %0 = vector.load %arg1[%c0, %c0_0] : memref<256x128xbf16, #tpu.memory_space<vmem>>, vector<256x128xbf16>
    %c0_1 = arith.constant 0 : index
    %c0_2 = arith.constant 0 : index
    %1 = vector.load %arg2[%c0_1, %c0_2] : memref<128x256xbf16, #tpu.memory_space<vmem>>, vector<128x256xbf16>
    %cst = arith.constant dense<0.000000e+00> : vector<256x256xf32>
    %2 = tpu.matmul %0, %1, %cst {dimension_numbers = #tpu.dot_dimension_numbers<[1], [0], [0], [1], [0, 0, 1, 1], [], []>} : vector<256x128xbf16>, vector<128x256xbf16>, vector<256x256xf32> -> vector<256x256xf32>
    %c0_3 = arith.constant 0 : index
    %c0_4 = arith.constant 0 : index
    %3 = vector.load %arg3[%c0_3, %c0_4] : memref<1x256xf32, #tpu.memory_space<vmem>>, vector<1x256xf32>
    %4 = vector.broadcast %3 : vector<1x256xf32> to vector<256x256xf32>
    %5 = arith.addf %2, %4 : vector<256x256xf32>
    %6 = vector.extract_strided_slice %5 {offsets = [0, 0], sizes = [256, 128], strides = [1, 1]} : vector<256x256xf32> to vector<256x128xf32>
    %7 = arith.truncf %6 : vector<256x128xf32> to vector<256x128xbf16>
    %c0_5 = arith.constant 0 : index
    %c0_6 = arith.constant 0 : index
    %8 = vector.load %arg4[%c0_5, %c0_6] : memref<256x128xbf16, #tpu.memory_space<vmem>>, vector<256x128xbf16>
    tpu.vector_store %arg4[%c0_5, %c0_6], %7 {strides = array<i32>} : memref<256x128xbf16, #tpu.memory_space<vmem>>, vector<256x128xbf16>,
    %9 = vector.extract_strided_slice %5 {offsets = [0, 128], sizes = [256, 128], strides = [1, 1]} : vector<256x256xf32> to vector<256x128xf32>
    %c0_7 = arith.constant 0 : index
    %c0_8 = arith.constant 0 : index
    %10 = vector.load %arg5[%c0_7, %c0_8] : memref<256x128xf32, #tpu.memory_space<vmem>>, vector<256x128xf32>
    tpu.vector_store %arg5[%c0_7, %c0_8], %9 {strides = array<i32>} : memref<256x128xf32, #tpu.memory_space<vmem>>, vector<256x128xf32>,
    return
  }
  func.func @transform_0(%arg0: i32) -> (i32, i32) {
    %c0_i32 = arith.constant 0 : i32
    %c0_i32_0 = arith.constant 0 : i32
    return %arg0, %c0_i32 : i32, i32
  }
  func.func @transform_1(%arg0: i32) -> (i32, i32) {
    %c0_i32 = arith.constant 0 : i32
    %c0_i32_0 = arith.constant 0 : i32
    %c0_i32_1 = arith.constant 0 : i32
    return %c0_i32, %c0_i32_0 : i32, i32
  }
  func.func @transform_2(%arg0: i32) -> (i32, i32) {
    %c0_i32 = arith.constant 0 : i32
    %c0_i32_0 = arith.constant 0 : i32
    %c0_i32_1 = arith.constant 0 : i32
    return %c0_i32, %c0_i32_0 : i32, i32
  }
  func.func @transform_3(%arg0: i32) -> (i32, i32) {
    %c0_i32 = arith.constant 0 : i32
    %c0_i32_0 = arith.constant 0 : i32
    return %arg0, %c0_i32 : i32, i32
  }
  func.func @transform_4(%arg0: i32) -> (i32, i32) {
    %c0_i32 = arith.constant 0 : i32
    %c0_i32_0 = arith.constant 0 : i32
    return %arg0, %c0_i32 : i32, i32
  }
}

</mosaic_0001>

<llo_original>
// kernel: tpu_custom_call.1
$region0: #{tpu_custom_call.1}
  #allocation0 [shape = 'u32[]', space=smem, size = 0x4, offset = 0x4, fixed_abs, tag = 'smem constant byte address 0x4 - core index']
  #allocation1 [shape = 'u32[144,128]{1,0:T(1,128)}', space=vmem, size = 0x12000, scoped, tag = 'internal scratch']
  %s0 = inlined_call_operand.hbm [shape: bf16[512,128], index: 0, kind: input, shape index: {}]
  %s1 = inlined_call_operand.hbm [shape: bf16[128,256], index: 1, kind: input, shape index: {}]
  %s2 = inlined_call_operand.vmem [shape: f32[1,256], index: 2, kind: input, shape index: {}]
  %s3 = inlined_call_operand.hbm [shape: bf16[512,128], index: 3, kind: output, shape index: {0}]
  %s4 = inlined_call_operand.hbm [shape: f32[512,128], index: 4, kind: output, shape index: {1}]
  %5 = xla_tuple %s3, %s4
  %s6 = sld [smem:[#allocation0]]
  $region61: #{tpu_custom_call.1} parent=0
    _
  %s8 = ssub.s32 1, %s6
  %s9 = scalar_select 0, %s8, %s6
  $region1: #{tpu_custom_call.1} parent=0
    #allocation2 [shape = 'u8[131072]{0}', space=vmem, size = 0x20000, scoped, tag = 'input window, operand 0']
    #allocation3 [shape = 's32[2]{0}', space=sflag, size = 0x8, scoped, tag = 'scoped memory for tpu_custom_call.1']
    #allocation4 [shape = 's32[2]{0}', space=sflag, size = 0x8, scoped, tag = 'scoped memory for tpu_custom_call.1']
    #allocation5 [shape = 'u8[65536]{0}', space=vmem, size = 0x10000, scoped, tag = 'input window, operand 1, single buffered']
    #allocation6 [shape = 's32[1]{0}', space=sflag, size = 0x4, scoped, tag = 'scoped memory for tpu_custom_call.1']
    #allocation7 [shape = 'u8[131072]{0}', space=vmem, size = 0x20000, scoped, tag = 'output window, operand 0']
    #allocation8 [shape = 'u8[262144]{0}', space=vmem, size = 0x40000, scoped, tag = 'output window, operand 1']
    #allocation9 [shape = 's32[2]{0}', space=sflag, size = 0x8, scoped, tag = 'scoped memory for tpu_custom_call.1']
    %10 = vsyncpa [#allocation3], 0
    %s11 = scalar_lea.sflag [#allocation3], 1
    %12 = vsyncpa %s11, 0
    %13 = vsyncpa [#allocation6], 0
    %14 = vsyncpa [#allocation4], 0
    %s15 = scalar_lea.sflag [#allocation4], 1
    %16 = vsyncpa %s15, 0
    %17 = vsyncpa [#allocation9], 0
    %s18 = scalar_lea.sflag [#allocation9], 1
    %19 = vsyncpa %s18, 0
    loop: start=0, step=1, limit=4
    $region2: #{tpu_custom_call.1} parent=1 // loop_pre_header
      _
    $region3: #{tpu_custom_call.1} parent=1 // loop_header
      %s21 = sphi 0, %s25
      %p22 = scmp.ge.s32.totalorder %s21, 4
      %s31 = sphi 0, %s33
      %s34 = sphi 0, %s31
      %s35 = sphi 0, %s34
      %s51 = sphi 0, %s35
      %s55 = sphi 0, %s55
      %s57 = sphi 0, %s55
      %s58 = sphi 0, %s57
      %s72 = sphi 0, %s58
      %s76 = sphi 0, %s76
      %s78 = sphi 0, %s76
      %s79 = sphi 0, %s78
      %s93 = sphi 0, %s79
      %s99 = sphi 0, %s101
      %s102 = sphi 0, %s99
      %s103 = sphi 0, %s102
      %s119 = sphi 0, %s103
      %s125 = sphi 0, %s127
      %s128 = sphi 0, %s125
      %s129 = sphi 0, %s128
      %s145 = sphi 0, %s129
    $region4: #{tpu_custom_call.1} parent=1 // loop_header_branch
      %24 = sbr.rel (%p22) target = $region8
    $region5: #{tpu_custom_call.1} parent=1 // loop_body
      %s26 = ssub.s32 %s21, 1
      %s27 = ssub.s32 %s21, 2
      %s28 = sadd.s32 %s21, 1
      %s29 = ssub.s32 %s21, %s28
      %p30 = scmp.eq.s32.totalorder %s29, 0
      %s32 = sadd.s32 %s31, 1
      %s33 = scalar_select %p30, %s31, %s32
      %p36 = pneg %p30
      %p37 = scmp.eq.s32.totalorder %s21, 1
      %p38 = por %p36, %p37
      %p39 = scmp.ne.s32.totalorder %s31, %s34
      %p40 = scmp.eq.s32.totalorder %s21, 0
      %p41 = por %p39, %p40
      %p42 = scmp.ne.s32.totalorder %s31, %s34
      %p43 = scmp.eq.s32.totalorder %s26, 1
      %p44 = por %p42, %p43
      %p45 = scmp.ne.s32.totalorder %s34, %s35
      %p46 = scmp.eq.s32.totalorder %s26, 0
      %p47 = por %p45, %p46
      %p48 = scmp.ne.s32.totalorder %s34, %s35
      %p49 = scmp.eq.s32.totalorder %s27, 1
      %p50 = por %p48, %p49
      %p52 = scmp.ne.s32.totalorder %s35, %s51
      %p53 = scmp.eq.s32.totalorder %s27, 0
      %p54 = por %p52, %p53
      %s56 = sadd.s32 %s55, 1
      %p59 = scmp.eq.s32.totalorder %s21, 1
      %p60 = scmp.ne.s32.totalorder %s55, %s57
      %p61 = scmp.eq.s32.totalorder %s21, 0
      %p62 = por %p60, %p61
      %p63 = scmp.ne.s32.totalorder %s55, %s57
      %p64 = scmp.eq.s32.totalorder %s26, 1
      %p65 = por %p63, %p64
      %p66 = scmp.ne.s32.totalorder %s57, %s58
      %p67 = scmp.eq.s32.totalorder %s26, 0
      %p68 = por %p66, %p67
      %p69 = scmp.ne.s32.totalorder %s57, %s58
      %p70 = scmp.eq.s32.totalorder %s27, 1
      %p71 = por %p69, %p70
      %p73 = scmp.ne.s32.totalorder %s58, %s72
      %p74 = scmp.eq.s32.totalorder %s27, 0
      %p75 = por %p73, %p74
      %s77 = sadd.s32 %s76, 1
      %p80 = scmp.eq.s32.totalorder %s21, 1
      %p81 = scmp.ne.s32.totalorder %s76, %s78
      %p82 = scmp.eq.s32.totalorder %s21, 0
      %p83 = por %p81, %p82
      %p84 = scmp.ne.s32.totalorder %s76, %s78
      %p85 = scmp.eq.s32.totalorder %s26, 1
      %p86 = por %p84, %p85
      %p87 = scmp.ne.s32.totalorder %s78, %s79
      %p88 = scmp.eq.s32.totalorder %s26, 0
      %p89 = por %p87, %p88
      %p90 = scmp.ne.s32.totalorder %s78, %s79
      %p91 = scmp.eq.s32.totalorder %s27, 1
      %p92 = por %p90, %p91
      %p94 = scmp.ne.s32.totalorder %s79, %s93
      %p95 = scmp.eq.s32.totalorder %s27, 0
      %p96 = por %p94, %p95
      %s97 = ssub.s32 %s21, %s28
      %p98 = scmp.eq.s32.totalorder %s97, 0
      %s100 = sadd.s32 %s99, 1
      %s101 = scalar_select %p98, %s99, %s100
      %p104 = pneg %p98
      %p105 = scmp.eq.s32.totalorder %s21, 1
      %p106 = por %p104, %p105
      %p107 = scmp.ne.s32.totalorder %s99, %s102
      %p108 = scmp.eq.s32.totalorder %s21, 0
      %p109 = por %p107, %p108
      %p110 = scmp.ne.s32.totalorder %s99, %s102
      %p111 = scmp.eq.s32.totalorder %s26, 1
      %p112 = por %p110, %p111
      %p113 = scmp.ne.s32.totalorder %s102, %s103
      %p114 = scmp.eq.s32.totalorder %s26, 0
      %p115 = por %p113, %p114
      %p116 = scmp.ne.s32.totalorder %s102, %s103
      %p117 = scmp.eq.s32.totalorder %s27, 1
      %p118 = por %p116, %p117
      %p120 = scmp.ne.s32.totalorder %s103, %s119
      %p121 = scmp.eq.s32.totalorder %s27, 0
      %p122 = por %p120, %p121
      %s123 = ssub.s32 %s21, %s28
      %p124 = scmp.eq.s32.totalorder %s123, 0
      %s126 = sadd.s32 %s125, 1
      %s127 = scalar_select %p124, %s125, %s126
      %p130 = pneg %p124
      %p131 = scmp.eq.s32.totalorder %s21, 1
      %p132 = por %p130, %p131
      %p133 = scmp.ne.s32.totalorder %s125, %s128
      %p134 = scmp.eq.s32.totalorder %s21, 0
      %p135 = por %p133, %p134
      %p136 = scmp.ne.s32.totalorder %s125, %s128
      %p137 = scmp.eq.s32.totalorder %s26, 1
      %p138 = por %p136, %p137
      %p139 = scmp.ne.s32.totalorder %s128, %s129
      %p140 = scmp.eq.s32.totalorder %s26, 0
      %p141 = por %p139, %p140
      %p142 = scmp.ne.s32.totalorder %s128, %s129
      %p143 = scmp.eq.s32.totalorder %s27, 1
      %p144 = por %p142, %p143
      %p146 = scmp.ne.s32.totalorder %s129, %s145
      %p147 = scmp.eq.s32.totalorder %s27, 0
      %p148 = por %p146, %p147
      %p149 = scmp.le.s32.totalorder 1, %s21
      %p150 = scmp.lt.s32.totalorder %s21, 3
      %p151 = pnand %p149, %p150
      %p152 = pneg %p151
      // Predicated region
      $region9: #{tpu_custom_call.1} parent=5 // pred_check
        _
      $region10: #{tpu_custom_call.1} parent=5 // pred_check_branch
        %154 = sbr.rel (%p151) target = $region12
      $region11: #{tpu_custom_call.1} parent=5 // pred_region
        %s155 = ssub.s32 %s21, 1
        // Predicated region
        $region13: #{tpu_custom_call.1} parent=11 // pred_check
          %p156 = pneg %p68
        $region14: #{tpu_custom_call.1} parent=11 // pred_check_branch
          %158 = sbr.rel (%p156) target = $region16
        $region15: #{tpu_custom_call.1} parent=11 // pred_region
          %s160 = ssub.s32 2048, 2048
          %161 = vsyncadd [#allocation6], %s160
          %s162 = sshll.u32 [#allocation5], 4
          %s163 = int_to_ptr.vmem [resolvable:$true] %s162
          %168 = dma.hbm_to_vmem [thread:$0]  %s1, 2048, %s163, [#allocation6], 128, 128, 8
        $region16: #{tpu_custom_call.1} parent=11 // pred_fallthru
          _
        // Predicated region
        $region17: #{tpu_custom_call.1} parent=11 // pred_check
          %p169 = pneg %p89
        $region18: #{tpu_custom_call.1} parent=11 // pred_check_branch
          %171 = sbr.rel (%p169) target = $region20
        $region19: #{tpu_custom_call.1} parent=11 // pred_region
          _
        $region20: #{tpu_custom_call.1} parent=11 // pred_fallthru
          _
      $region12: #{tpu_custom_call.1} parent=5 // pred_fallthru
        _
      %p172 = scmp.lt.s32.totalorder %s21, 2
      // Predicated region
      $region21: #{tpu_custom_call.1} parent=5 // pred_check
        %p173 = pneg %p172
      $region22: #{tpu_custom_call.1} parent=5 // pred_check_branch
        %175 = sbr.rel (%p173) target = $region24
      $region23: #{tpu_custom_call.1} parent=5 // pred_region
        // Predicated region
        $region25: #{tpu_custom_call.1} parent=23 // pred_check
          %p176 = pneg %p41
        $region26: #{tpu_custom_call.1} parent=23 // pred_check_branch
          %178 = sbr.rel (%p176) target = $region28
        $region27: #{tpu_custom_call.1} parent=23 // pred_region
          %s179 = sand.u32 %s31, 1
          %s180 = scalar_lea.sflag [#allocation3], %s179
          %s181 = sand.u32 %s31, 1
          %s182 = smul.addr %s181, 128
          %s183 = scalar_lea.vmem [#allocation2], %s182
          %s184 = smul.u32 32, %s21
          %s186 = ssub.s32 2048, 2048
          %187 = vsyncadd %s180, %s186
          %s188 = smul.addr %s184, 64
          %s189 = scalar_lea.hbm %s0, %s188
          %s190 = sshll.u32 %s183, 4
          %s191 = int_to_ptr.vmem [resolvable:$true] %s190
          %196 = dma.hbm_to_vmem [thread:$0]  %s189, 2048, %s191, %s180, 64, 64, 4
        $region28: #{tpu_custom_call.1} parent=23 // pred_fallthru
          _
      $region24: #{tpu_custom_call.1} parent=5 // pred_fallthru
        _
      %p197 = scmp.le.s32.totalorder 1, %s21
      %p198 = scmp.lt.s32.totalorder %s21, 3
      %p199 = pnand %p197, %p198
      %p200 = pneg %p199
      // Predicated region
      $region29: #{tpu_custom_call.1} parent=5 // pred_check
        _
      $region30: #{tpu_custom_call.1} parent=5 // pred_check_branch
        %202 = sbr.rel (%p199) target = $region32
      $region31: #{tpu_custom_call.1} parent=5 // pred_region
        %s203 = ssub.s32 %s21, 1
        %s204 = sand.u32 %s34, 1
        %s205 = scalar_lea.sflag [#allocation3], %s204
        %s206 = sand.u32 %s34, 1
        %s207 = smul.addr %s206, 128
        %s208 = scalar_lea.vmem [#allocation2], %s207
        // Predicated region
        $region33: #{tpu_custom_call.1} parent=31 // pred_check
          %p209 = pneg %p47
        $region34: #{tpu_custom_call.1} parent=31 // pred_check_branch
          %211 = sbr.rel (%p209) target = $region36
        $region35: #{tpu_custom_call.1} parent=31 // pred_region
          %212 = dma.done %s205, 2048
        $region36: #{tpu_custom_call.1} parent=31 // pred_fallthru
          _
        // Predicated region
        $region37: #{tpu_custom_call.1} parent=31 // pred_check
          %p213 = pneg %p68
        $region38: #{tpu_custom_call.1} parent=31 // pred_check_branch
          %215 = sbr.rel (%p213) target = $region40
        $region39: #{tpu_custom_call.1} parent=31 // pred_region
          %216 = dma.done [#allocation6], 2048
        $region40: #{tpu_custom_call.1} parent=31 // pred_fallthru
          _
        %s217 = sand.u32 %s34, 1
        %s218 = scalar_lea.sflag [#allocation3], %s217
        %s219 = sand.u32 %s34, 1
        %s220 = smul.addr %s219, 128
        %s221 = scalar_lea.vmem [#allocation2], %s220
        %p222 = pneg %p47
        %p223 = pneg %p44
        %p224 = pneg %p68
        %p225 = pneg %p65
        %p226 = pneg %p89
        %p227 = pneg %p86
        %p228 = pneg %p115
        %p229 = pneg %p112
        %s230 = sand.u32 %s102, 1
        %s231 = scalar_lea.sflag [#allocation4], %s230
        %s232 = sand.u32 %s102, 1
        %s233 = smul.addr %s232, 128
        %s234 = scalar_lea.vmem [#allocation7], %s233
        %p235 = pneg %p141
        %p236 = pneg %p138
        %s237 = sand.u32 %s128, 1
        %s238 = scalar_lea.sflag [#allocation9], %s237
        %s239 = sand.u32 %s128, 1
        %s240 = smul.addr %s239, 256
        %s241 = scalar_lea.vmem [#allocation8], %s240
        %s242 = smul.u32 32, %s26
        %s243 = smul.u32 32, %s26
        %s244 = smul.u32 32, %s26
        %v246 = vld [vmem:[%s208] sm:$0xf]
        %v247 = vld [vmem:[%s208 + $0x4] sm:$0xf]
        %v248 = vld [vmem:[%s208 + $0x8] sm:$0xf]
        %v249 = vld [vmem:[%s208 + $0xc] sm:$0xf]
        %v250 = vld [vmem:[%s208 + $0x10] sm:$0xf]
        %v251 = vld [vmem:[%s208 + $0x14] sm:$0xf]
        %v252 = vld [vmem:[%s208 + $0x18] sm:$0xf]
        %v253 = vld [vmem:[%s208 + $0x1c] sm:$0xf]
        %v254 = vld [vmem:[%s208 + $0x20] sm:$0xf]
        %v255 = vld [vmem:[%s208 + $0x24] sm:$0xf]
        %v256 = vld [vmem:[%s208 + $0x28] sm:$0xf]
        %v257 = vld [vmem:[%s208 + $0x2c] sm:$0xf]
        %v258 = vld [vmem:[%s208 + $0x30] sm:$0xf]
        %v259 = vld [vmem:[%s208 + $0x34] sm:$0xf]
        %v260 = vld [vmem:[%s208 + $0x38] sm:$0xf]
        %v261 = vld [vmem:[%s208 + $0x3c] sm:$0xf]
        %v262 = vld [vmem:[%s208 + $0x40] sm:$0xf]
        %v263 = vld [vmem:[%s208 + $0x44] sm:$0xf]
        %v264 = vld [vmem:[%s208 + $0x48] sm:$0xf]
        %v265 = vld [vmem:[%s208 + $0x4c] sm:$0xf]
        %v266 = vld [vmem:[%s208 + $0x50] sm:$0xf]
        %v267 = vld [vmem:[%s208 + $0x54] sm:$0xf]
        %v268 = vld [vmem:[%s208 + $0x58] sm:$0xf]
        %v269 = vld [vmem:[%s208 + $0x5c] sm:$0xf]
        %v270 = vld [vmem:[%s208 + $0x60] sm:$0xf]
        %v271 = vld [vmem:[%s208 + $0x64] sm:$0xf]
        %v272 = vld [vmem:[%s208 + $0x68] sm:$0xf]
        %v273 = vld [vmem:[%s208 + $0x6c] sm:$0xf]
        %v274 = vld [vmem:[%s208 + $0x70] sm:$0xf]
        %v275 = vld [vmem:[%s208 + $0x74] sm:$0xf]
        %v276 = vld [vmem:[%s208 + $0x78] sm:$0xf]
        %v277 = vld [vmem:[%s208 + $0x7c] sm:$0xf]
        %v278 = vld [vmem:[#allocation5] sm:$0xff]
        %v279 = vld [vmem:[#allocation5 + $0x8] sm:$0xff]
        %v280 = vld [vmem:[#allocation5 + $0x10] sm:$0xff]
        %v281 = vld [vmem:[#allocation5 + $0x18] sm:$0xff]
        %v282 = vld [vmem:[#allocation5 + $0x20] sm:$0xff]
        %v283 = vld [vmem:[#allocation5 + $0x28] sm:$0xff]
        %v284 = vld [vmem:[#allocation5 + $0x30] sm:$0xff]
        %v285 = vld [vmem:[#allocation5 + $0x38] sm:$0xff]
        %v286 = vld [vmem:[#allocation5 + $0x40] sm:$0xff]
        %v287 = vld [vmem:[#allocation5 + $0x48] sm:$0xff]
        %v288 = vld [vmem:[#allocation5 + $0x50] sm:$0xff]
        %v289 = vld [vmem:[#allocation5 + $0x58] sm:$0xff]
        %v290 = vld [vmem:[#allocation5 + $0x60] sm:$0xff]
        %v291 = vld [vmem:[#allocation5 + $0x68] sm:$0xff]
        %v292 = vld [vmem:[#allocation5 + $0x70] sm:$0xff]
        %v293 = vld [vmem:[#allocation5 + $0x78] sm:$0xff]
        %v294 = vld [vmem:[%s2] sm:$0x3]
        %v296 = vlaneseq
        %v297 = vshrl.u32 %v296, 7
        %v298 = vsub.s32 0, %v297
        %v299 = vrot.slane %v294, %v298
        %v300 = vlaneseq
        %v301 = vshrl.u32 %v300, 7
        %v302 = vsub.s32 1, %v301
        %v303 = vrot.slane %v294, %v302
        %v338 = vunpack.c.l.b16 %v246
        %v339 = vunpack.c.l.b16 %v247
        %v340 = vunpack.c.l.b16 %v248
        %v341 = vunpack.c.l.b16 %v249
        %v342 = vunpack.c.l.b16 %v250
        %v343 = vunpack.c.l.b16 %v251
        %v344 = vunpack.c.l.b16 %v252
        %v345 = vunpack.c.l.b16 %v253
        %v346 = vunpack.c.l.b16 %v254
        %v347 = vunpack.c.l.b16 %v255
        %v348 = vunpack.c.l.b16 %v256
        %v349 = vunpack.c.l.b16 %v257
        %v350 = vunpack.c.l.b16 %v258
        %v351 = vunpack.c.l.b16 %v259
        %v352 = vunpack.c.l.b16 %v260
        %v353 = vunpack.c.l.b16 %v261
        %v354 = vunpack.c.l.b16 %v262
        %v355 = vunpack.c.l.b16 %v263
        %v356 = vunpack.c.l.b16 %v264
        %v357 = vunpack.c.l.b16 %v265
        %v358 = vunpack.c.l.b16 %v266
        %v359 = vunpack.c.l.b16 %v267
        %v360 = vunpack.c.l.b16 %v268
        %v361 = vunpack.c.l.b16 %v269
        %v362 = vunpack.c.l.b16 %v270
        %v363 = vunpack.c.l.b16 %v271
        %v364 = vunpack.c.l.b16 %v272
        %v365 = vunpack.c.l.b16 %v273
        %v366 = vunpack.c.l.b16 %v274
        %v367 = vunpack.c.l.b16 %v275
        %v368 = vunpack.c.l.b16 %v276
        %v369 = vunpack.c.l.b16 %v277
        %v370 = vpack.c.b16 %v339, %v338
        %v371 = vpack.c.b16 %v341, %v340
        %v372 = vpack.c.b16 %v343, %v342
        %v373 = vpack.c.b16 %v345, %v344
        %v374 = vpack.c.b16 %v347, %v346
        %v375 = vpack.c.b16 %v349, %v348
        %v376 = vpack.c.b16 %v351, %v350
        %v377 = vpack.c.b16 %v353, %v352
        %v378 = vpack.c.b16 %v355, %v354
        %v379 = vpack.c.b16 %v357, %v356
        %v380 = vpack.c.b16 %v359, %v358
        %v381 = vpack.c.b16 %v361, %v360
        %v382 = vpack.c.b16 %v363, %v362
        %v383 = vpack.c.b16 %v365, %v364
        %v384 = vpack.c.b16 %v367, %v366
        %v385 = vpack.c.b16 %v369, %v368
        %v418 = vunpack.c.l.b16 %v278
        %v419 = vunpack.c.h.b16 %v278
        %v420 = vunpack.c.l.b16 %v279
        %v421 = vunpack.c.h.b16 %v279
        %v422 = vunpack.c.l.b16 %v280
        %v423 = vunpack.c.h.b16 %v280
        %v424 = vunpack.c.l.b16 %v281
        %v425 = vunpack.c.h.b16 %v281
        %v426 = vunpack.c.l.b16 %v282
        %v427 = vunpack.c.h.b16 %v282
        %v428 = vunpack.c.l.b16 %v283
        %v429 = vunpack.c.h.b16 %v283
        %v430 = vunpack.c.l.b16 %v284
        %v431 = vunpack.c.h.b16 %v284
        %v432 = vunpack.c.l.b16 %v285
        %v433 = vunpack.c.h.b16 %v285
        %v434 = vunpack.c.l.b16 %v286
        %v435 = vunpack.c.h.b16 %v286
        %v436 = vunpack.c.l.b16 %v287
        %v437 = vunpack.c.h.b16 %v287
        %v438 = vunpack.c.l.b16 %v288
        %v439 = vunpack.c.h.b16 %v288
        %v440 = vunpack.c.l.b16 %v289
        %v441 = vunpack.c.h.b16 %v289
        %v442 = vunpack.c.l.b16 %v290
        %v443 = vunpack.c.h.b16 %v290
        %v444 = vunpack.c.l.b16 %v291
        %v445 = vunpack.c.h.b16 %v291
        %v446 = vunpack.c.l.b16 %v292
        %v447 = vunpack.c.h.b16 %v292
        %v448 = vunpack.c.l.b16 %v293
        %v449 = vunpack.c.h.b16 %v293
        %v450 = vpack.c.b16 %v420, %v418
        %v451 = vpack.c.b16 %v421, %v419
        %v452 = vpack.c.b16 %v424, %v422
        %v453 = vpack.c.b16 %v425, %v423
        %v454 = vpack.c.b16 %v428, %v426
        %v455 = vpack.c.b16 %v429, %v427
        %v456 = vpack.c.b16 %v432, %v430
        %v457 = vpack.c.b16 %v433, %v431
        %v458 = vpack.c.b16 %v436, %v434
        %v459 = vpack.c.b16 %v437, %v435
        %v460 = vpack.c.b16 %v440, %v438
        %v461 = vpack.c.b16 %v441, %v439
        %v462 = vpack.c.b16 %v444, %v442
        %v463 = vpack.c.b16 %v445, %v443
        %v464 = vpack.c.b16 %v448, %v446
        %v465 = vpack.c.b16 %v449, %v447
        %482 = vmatprep.subr.bf16.mxu0 %v465
        %483 = vmatpush1.bf16.msra.mxu0 %v464
        %484 = vmatprep.subr.bf16.mxu0 %v463
        %485 = vmatpush1.bf16.msra.mxu0 %v462
        %486 = vmatprep.subr.bf16.mxu0 %v461
        %487 = vmatpush1.bf16.msra.mxu0 %v460
        %488 = vmatprep.subr.bf16.mxu0 %v459
        %489 = vmatpush1.bf16.msra.mxu0 %v458
        %490 = vmatprep.subr.bf16.mxu0 %v457
        %491 = vmatpush1.bf16.msra.mxu0 %v456
        %492 = vmatprep.subr.bf16.mxu0 %v455
        %493 = vmatpush1.bf16.msra.mxu0 %v454
        %494 = vmatprep.subr.bf16.mxu0 %v453
        %495 = vmatpush1.bf16.msra.mxu0 %v452
        %496 = vmatprep.subr.bf16.mxu0 %v451
        %497 = vmatpush1.bf16.msra.mxu0 %v450
        %498 = vmatprep.subr.bf16.mxu0 0
        %499 = vmatpush2.bf16.msra.mxu0 0
        %500 = vmatprep.subr.bf16.mxu0 0
        %501 = vmatpush2.bf16.msra.mxu0 0
        %502 = vmatprep.subr.bf16.mxu0 0
        %503 = vmatpush2.bf16.msra.mxu0 0
        %504 = vmatprep.subr.bf16.mxu0 0
        %505 = vmatpush2.bf16.msra.mxu0 0
        %506 = vmatprep.subr.bf16.mxu0 0
        %507 = vmatpush2.bf16.msra.mxu0 0
        %508 = vmatprep.subr.bf16.mxu0 0
        %509 = vmatpush2.bf16.msra.mxu0 0
        %510 = vmatprep.subr.bf16.mxu0 0
        %511 = vmatpush2.bf16.msra.mxu0 0
        %512 = vmatprep.subr.bf16.mxu0 0
        %513 = vmatpush2.bf16.msra.mxu0 0
        %514 = vmatprep.mubr.bf16.mxu0 0
        %515 = vmatmul.mubr.bf16.gmra.mxu0 %v370
        %v516 = vpop.f32.mrf.mxu0
        %v517 = vadd.f32 %v299, %v516
        %v518 = vpop.f32.mrf.mxu0
        %v519 = vadd.f32 %v303, %v518
        %v520 = vpop.f32.mrf.mxu0
        %v521 = vadd.f32 %v299, %v520
        %v522 = vpop.f32.mrf.mxu0
        %v523 = vadd.f32 %v303, %v522
        %524 = vmatprep.mubr.bf16.mxu0 0
        %525 = vmatmul.mubr.bf16.gmra.mxu0 %v371
        %v526 = vpop.f32.mrf.mxu0
        %v527 = vadd.f32 %v299, %v526
        %v528 = vpop.f32.mrf.mxu0
        %v529 = vadd.f32 %v303, %v528
        %v530 = vpop.f32.mrf.mxu0
        %v531 = vadd.f32 %v299, %v530
        %v532 = vpop.f32.mrf.mxu0
        %v533 = vadd.f32 %v303, %v532
        %534 = vmatprep.mubr.bf16.mxu0 0
        %535 = vmatmul.mubr.bf16.gmra.mxu0 %v372
        %v536 = vpop.f32.mrf.mxu0
        %v537 = vadd.f32 %v299, %v536
        %v538 = vpop.f32.mrf.mxu0
        %v539 = vadd.f32 %v303, %v538
        %v540 = vpop.f32.mrf.mxu0
        %v541 = vadd.f32 %v299, %v540
        %v542 = vpop.f32.mrf.mxu0
        %v543 = vadd.f32 %v303, %v542
        %544 = vmatprep.mubr.bf16.mxu0 0
        %545 = vmatmul.mubr.bf16.gmra.mxu0 %v373
        %v546 = vpop.f32.mrf.mxu0
        %v547 = vadd.f32 %v299, %v546
        %v548 = vpop.f32.mrf.mxu0
        %v549 = vadd.f32 %v303, %v548
        %v550 = vpop.f32.mrf.mxu0
        %v551 = vadd.f32 %v299, %v550
        %v552 = vpop.f32.mrf.mxu0
        %v553 = vadd.f32 %v303, %v552
        %554 = vmatprep.mubr.bf16.mxu0 0
        %555 = vmatmul.mubr.bf16.gmra.mxu0 %v374
        %v556 = vpop.f32.mrf.mxu0
        %v557 = vadd.f32 %v299, %v556
        %v558 = vpop.f32.mrf.mxu0
        %v559 = vadd.f32 %v303, %v558
        %v560 = vpop.f32.mrf.mxu0
        %v561 = vadd.f32 %v299, %v560
        %v562 = vpop.f32.mrf.mxu0
        %v563 = vadd.f32 %v303, %v562
        %564 = vmatprep.mubr.bf16.mxu0 0
        %565 = vmatmul.mubr.bf16.gmra.mxu0 %v375
        %v566 = vpop.f32.mrf.mxu0
        %v567 = vadd.f32 %v299, %v566
        %v568 = vpop.f32.mrf.mxu0
        %v569 = vadd.f32 %v303, %v568
        %v570 = vpop.f32.mrf.mxu0
        %v571 = vadd.f32 %v299, %v570
        %v572 = vpop.f32.mrf.mxu0
        %v573 = vadd.f32 %v303, %v572
        %574 = vmatprep.mubr.bf16.mxu0 0
        %575 = vmatmul.mubr.bf16.gmra.mxu0 %v376
        %v576 = vpop.f32.mrf.mxu0
        %v577 = vadd.f32 %v299, %v576
        %v578 = vpop.f32.mrf.mxu0
        %v579 = vadd.f32 %v303, %v578
        %v580 = vpop.f32.mrf.mxu0
        %v581 = vadd.f32 %v299, %v580
        %v582 = vpop.f32.mrf.mxu0
        %v583 = vadd.f32 %v303, %v582
        %584 = vmatprep.mubr.bf16.mxu0 0
        %585 = vmatmul.mubr.bf16.gmra.mxu0 %v377
        %v586 = vpop.f32.mrf.mxu0
        %v587 = vadd.f32 %v299, %v586
        %v588 = vpop.f32.mrf.mxu0
        %v589 = vadd.f32 %v303, %v588
        %v590 = vpop.f32.mrf.mxu0
        %v591 = vadd.f32 %v299, %v590
        %v592 = vpop.f32.mrf.mxu0
        %v593 = vadd.f32 %v303, %v592
        %594 = vmatprep.mubr.bf16.mxu0 0
        %595 = vmatmul.mubr.bf16.gmra.mxu0 %v378
        %v596 = vpop.f32.mrf.mxu0
        %v597 = vadd.f32 %v299, %v596
        %v598 = vpop.f32.mrf.mxu0
        %v599 = vadd.f32 %v303, %v598
        %v600 = vpop.f32.mrf.mxu0
        %v601 = vadd.f32 %v299, %v600
        %v602 = vpop.f32.mrf.mxu0
        %v603 = vadd.f32 %v303, %v602
        %604 = vmatprep.mubr.bf16.mxu0 0
        %605 = vmatmul.mubr.bf16.gmra.mxu0 %v379
        %v606 = vpop.f32.mrf.mxu0
        %v607 = vadd.f32 %v299, %v606
        %v608 = vpop.f32.mrf.mxu0
        %v609 = vadd.f32 %v303, %v608
        %v610 = vpop.f32.mrf.mxu0
        %v611 = vadd.f32 %v299, %v610
        %v612 = vpop.f32.mrf.mxu0
        %v613 = vadd.f32 %v303, %v612
        %614 = vmatprep.mubr.bf16.mxu0 0
        %615 = vmatmul.mubr.bf16.gmra.mxu0 %v380
        %v616 = vpop.f32.mrf.mxu0
        %v617 = vadd.f32 %v299, %v616
        %v618 = vpop.f32.mrf.mxu0
        %v619 = vadd.f32 %v303, %v618
        %v620 = vpop.f32.mrf.mxu0
        %v621 = vadd.f32 %v299, %v620
        %v622 = vpop.f32.mrf.mxu0
        %v623 = vadd.f32 %v303, %v622
        %624 = vmatprep.mubr.bf16.mxu0 0
        %625 = vmatmul.mubr.bf16.gmra.mxu0 %v381
        %v626 = vpop.f32.mrf.mxu0
        %v627 = vadd.f32 %v299, %v626
        %v628 = vpop.f32.mrf.mxu0
        %v629 = vadd.f32 %v303, %v628
        %v630 = vpop.f32.mrf.mxu0
        %v631 = vadd.f32 %v299, %v630
        %v632 = vpop.f32.mrf.mxu0
        %v633 = vadd.f32 %v303, %v632
        %634 = vmatprep.mubr.bf16.mxu0 0
        %635 = vmatmul.mubr.bf16.gmra.mxu0 %v382
        %v636 = vpop.f32.mrf.mxu0
        %v637 = vadd.f32 %v299, %v636
        %v638 = vpop.f32.mrf.mxu0
        %v639 = vadd.f32 %v303, %v638
        %v640 = vpop.f32.mrf.mxu0
        %v641 = vadd.f32 %v299, %v640
        %v642 = vpop.f32.mrf.mxu0
        %v643 = vadd.f32 %v303, %v642
        %644 = vmatprep.mubr.bf16.mxu0 0
        %645 = vmatmul.mubr.bf16.gmra.mxu0 %v383
        %v646 = vpop.f32.mrf.mxu0
        %v647 = vadd.f32 %v299, %v646
        %v648 = vpop.f32.mrf.mxu0
        %v649 = vadd.f32 %v303, %v648
        %v650 = vpop.f32.mrf.mxu0
        %v651 = vadd.f32 %v299, %v650
        %v652 = vpop.f32.mrf.mxu0
        %v653 = vadd.f32 %v303, %v652
        %654 = vmatprep.mubr.bf16.mxu0 0
        %655 = vmatmul.mubr.bf16.gmra.mxu0 %v384
        %v656 = vpop.f32.mrf.mxu0
        %v657 = vadd.f32 %v299, %v656
        %v658 = vpop.f32.mrf.mxu0
        %v659 = vadd.f32 %v303, %v658
        %v660 = vpop.f32.mrf.mxu0
        %v661 = vadd.f32 %v299, %v660
        %v662 = vpop.f32.mrf.mxu0
        %v663 = vadd.f32 %v303, %v662
        %664 = vmatprep.mubr.bf16.mxu0 0
        %665 = vmatmul.mubr.bf16.gmra.mxu0 %v385
        %v666 = vpop.f32.mrf.mxu0
        %v667 = vadd.f32 %v299, %v666
        %v668 = vpop.f32.mrf.mxu0
        %v669 = vadd.f32 %v303, %v668
        %v670 = vpop.f32.mrf.mxu0
        %v671 = vadd.f32 %v299, %v670
        %v672 = vpop.f32.mrf.mxu0
        %v673 = vadd.f32 %v303, %v672
        %674 = vdwg.mxu0
        %v675 = vpack.c.bf16 %v521, %v517
        %v676 = vpack.c.bf16 %v531, %v527
        %v677 = vpack.c.bf16 %v541, %v537
        %v678 = vpack.c.bf16 %v551, %v547
        %v679 = vpack.c.bf16 %v561, %v557
        %v680 = vpack.c.bf16 %v571, %v567
        %v681 = vpack.c.bf16 %v581, %v577
        %v682 = vpack.c.bf16 %v591, %v587
        %v683 = vpack.c.bf16 %v601, %v597
        %v684 = vpack.c.bf16 %v611, %v607
        %v685 = vpack.c.bf16 %v621, %v617
        %v686 = vpack.c.bf16 %v631, %v627
        %v687 = vpack.c.bf16 %v641, %v637
        %v688 = vpack.c.bf16 %v651, %v647
        %v689 = vpack.c.bf16 %v661, %v657
        %v690 = vpack.c.bf16 %v671, %v667
        %v707 = vunpack.c.l.b16 %v675
        %v708 = vunpack.c.h.b16 %v675
        %v709 = vunpack.c.l.b16 %v676
        %v710 = vunpack.c.h.b16 %v676
        %v711 = vunpack.c.l.b16 %v677
        %v712 = vunpack.c.h.b16 %v677
        %v713 = vunpack.c.l.b16 %v678
        %v714 = vunpack.c.h.b16 %v678
        %v715 = vunpack.c.l.b16 %v679
        %v716 = vunpack.c.h.b16 %v679
        %v717 = vunpack.c.l.b16 %v680
        %v718 = vunpack.c.h.b16 %v680
        %v719 = vunpack.c.l.b16 %v681
        %v720 = vunpack.c.h.b16 %v681
        %v721 = vunpack.c.l.b16 %v682
        %v722 = vunpack.c.h.b16 %v682
        %v723 = vunpack.c.l.b16 %v683
        %v724 = vunpack.c.h.b16 %v683
        %v725 = vunpack.c.l.b16 %v684
        %v726 = vunpack.c.h.b16 %v684
        %v727 = vunpack.c.l.b16 %v685
        %v728 = vunpack.c.h.b16 %v685
        %v729 = vunpack.c.l.b16 %v686
        %v730 = vunpack.c.h.b16 %v686
        %v731 = vunpack.c.l.b16 %v687
        %v732 = vunpack.c.h.b16 %v687
        %v733 = vunpack.c.l.b16 %v688
        %v734 = vunpack.c.h.b16 %v688
        %v735 = vunpack.c.l.b16 %v689
        %v736 = vunpack.c.h.b16 %v689
        %v737 = vunpack.c.l.b16 %v690
        %v738 = vunpack.c.h.b16 %v690
        %v739 = vpack.c.b16 %v707, %v707
        %v740 = vpack.c.b16 %v708, %v708
        %v741 = vpack.c.b16 %v709, %v709
        %v742 = vpack.c.b16 %v710, %v710
        %v743 = vpack.c.b16 %v711, %v711
        %v744 = vpack.c.b16 %v712, %v712
        %v745 = vpack.c.b16 %v713, %v713
        %v746 = vpack.c.b16 %v714, %v714
        %v747 = vpack.c.b16 %v715, %v715
        %v748 = vpack.c.b16 %v716, %v716
        %v749 = vpack.c.b16 %v717, %v717
        %v750 = vpack.c.b16 %v718, %v718
        %v751 = vpack.c.b16 %v719, %v719
        %v752 = vpack.c.b16 %v720, %v720
        %v753 = vpack.c.b16 %v721, %v721
        %v754 = vpack.c.b16 %v722, %v722
        %v755 = vpack.c.b16 %v723, %v723
        %v756 = vpack.c.b16 %v724, %v724
        %v757 = vpack.c.b16 %v725, %v725
        %v758 = vpack.c.b16 %v726, %v726
        %v759 = vpack.c.b16 %v727, %v727
        %v760 = vpack.c.b16 %v728, %v728
        %v761 = vpack.c.b16 %v729, %v729
        %v762 = vpack.c.b16 %v730, %v730
        %v763 = vpack.c.b16 %v731, %v731
        %v764 = vpack.c.b16 %v732, %v732
        %v765 = vpack.c.b16 %v733, %v733
        %v766 = vpack.c.b16 %v734, %v734
        %v767 = vpack.c.b16 %v735, %v735
        %v768 = vpack.c.b16 %v736, %v736
        %v769 = vpack.c.b16 %v737, %v737
        %v770 = vpack.c.b16 %v738, %v738
        %803 = vst [vmem:[%s234] sm:$0xf] %v739
        %804 = vst [vmem:[%s234 + $0x4] sm:$0xf] %v740
        %805 = vst [vmem:[%s234 + $0x8] sm:$0xf] %v741
        %806 = vst [vmem:[%s234 + $0xc] sm:$0xf] %v742
        %807 = vst [vmem:[%s234 + $0x10] sm:$0xf] %v743
        %808 = vst [vmem:[%s234 + $0x14] sm:$0xf] %v744
        %809 = vst [vmem:[%s234 + $0x18] sm:$0xf] %v745
        %810 = vst [vmem:[%s234 + $0x1c] sm:$0xf] %v746
        %811 = vst [vmem:[%s234 + $0x20] sm:$0xf] %v747
        %812 = vst [vmem:[%s234 + $0x24] sm:$0xf] %v748
        %813 = vst [vmem:[%s234 + $0x28] sm:$0xf] %v749
        %814 = vst [vmem:[%s234 + $0x2c] sm:$0xf] %v750
        %815 = vst [vmem:[%s234 + $0x30] sm:$0xf] %v751
        %816 = vst [vmem:[%s234 + $0x34] sm:$0xf] %v752
        %817 = vst [vmem:[%s234 + $0x38] sm:$0xf] %v753
        %818 = vst [vmem:[%s234 + $0x3c] sm:$0xf] %v754
        %819 = vst [vmem:[%s234 + $0x40] sm:$0xf] %v755
        %820 = vst [vmem:[%s234 + $0x44] sm:$0xf] %v756
        %821 = vst [vmem:[%s234 + $0x48] sm:$0xf] %v757
        %822 = vst [vmem:[%s234 + $0x4c] sm:$0xf] %v758
        %823 = vst [vmem:[%s234 + $0x50] sm:$0xf] %v759
        %824 = vst [vmem:[%s234 + $0x54] sm:$0xf] %v760
        %825 = vst [vmem:[%s234 + $0x58] sm:$0xf] %v761
        %826 = vst [vmem:[%s234 + $0x5c] sm:$0xf] %v762
        %827 = vst [vmem:[%s234 + $0x60] sm:$0xf] %v763
        %828 = vst [vmem:[%s234 + $0x64] sm:$0xf] %v764
        %829 = vst [vmem:[%s234 + $0x68] sm:$0xf] %v765
        %830 = vst [vmem:[%s234 + $0x6c] sm:$0xf] %v766
        %831 = vst [vmem:[%s234 + $0x70] sm:$0xf] %v767
        %832 = vst [vmem:[%s234 + $0x74] sm:$0xf] %v768
        %833 = vst [vmem:[%s234 + $0x78] sm:$0xf] %v769
        %834 = vst [vmem:[%s234 + $0x7c] sm:$0xf] %v770
        %835 = vst [vmem:[%s241] sm:$0xff] %v519
        %836 = vst [vmem:[%s241 + $0x8] sm:$0xff] %v523
        %837 = vst [vmem:[%s241 + $0x10] sm:$0xff] %v529
        %838 = vst [vmem:[%s241 + $0x18] sm:$0xff] %v533
        %839 = vst [vmem:[%s241 + $0x20] sm:$0xff] %v539
        %840 = vst [vmem:[%s241 + $0x28] sm:$0xff] %v543
        %841 = vst [vmem:[%s241 + $0x30] sm:$0xff] %v549
        %842 = vst [vmem:[%s241 + $0x38] sm:$0xff] %v553
        %843 = vst [vmem:[%s241 + $0x40] sm:$0xff] %v559
        %844 = vst [vmem:[%s241 + $0x48] sm:$0xff] %v563
        %845 = vst [vmem:[%s241 + $0x50] sm:$0xff] %v569
        %846 = vst [vmem:[%s241 + $0x58] sm:$0xff] %v573
        %847 = vst [vmem:[%s241 + $0x60] sm:$0xff] %v579
        %848 = vst [vmem:[%s241 + $0x68] sm:$0xff] %v583
        %849 = vst [vmem:[%s241 + $0x70] sm:$0xff] %v589
        %850 = vst [vmem:[%s241 + $0x78] sm:$0xff] %v593
        %851 = vst [vmem:[%s241 + $0x80] sm:$0xff] %v599
        %852 = vst [vmem:[%s241 + $0x88] sm:$0xff] %v603
        %853 = vst [vmem:[%s241 + $0x90] sm:$0xff] %v609
        %854 = vst [vmem:[%s241 + $0x98] sm:$0xff] %v613
        %855 = vst [vmem:[%s241 + $0xa0] sm:$0xff] %v619
        %856 = vst [vmem:[%s241 + $0xa8] sm:$0xff] %v623
        %857 = vst [vmem:[%s241 + $0xb0] sm:$0xff] %v629
        %858 = vst [vmem:[%s241 + $0xb8] sm:$0xff] %v633
        %859 = vst [vmem:[%s241 + $0xc0] sm:$0xff] %v639
        %860 = vst [vmem:[%s241 + $0xc8] sm:$0xff] %v643
        %861 = vst [vmem:[%s241 + $0xd0] sm:$0xff] %v649
        %862 = vst [vmem:[%s241 + $0xd8] sm:$0xff] %v653
        %863 = vst [vmem:[%s241 + $0xe0] sm:$0xff] %v659
        %864 = vst [vmem:[%s241 + $0xe8] sm:$0xff] %v663
        %865 = vst [vmem:[%s241 + $0xf0] sm:$0xff] %v669
        %866 = vst [vmem:[%s241 + $0xf8] sm:$0xff] %v673
        %s867 = sand.u32 %s102, 1
        %s868 = scalar_lea.sflag [#allocation4], %s867
        %s869 = sand.u32 %s102, 1
        %s870 = smul.addr %s869, 128
        %s871 = scalar_lea.vmem [#allocation7], %s870
        %s872 = sand.u32 %s128, 1
        %s873 = scalar_lea.sflag [#allocation9], %s872
        %s874 = sand.u32 %s128, 1
        %s875 = smul.addr %s874, 256
        %s876 = scalar_lea.vmem [#allocation8], %s875
        // Predicated region
        $region41: #{tpu_custom_call.1} parent=31 // pred_check
          %p877 = pneg %p112
        $region42: #{tpu_custom_call.1} parent=31 // pred_check_branch
          %879 = sbr.rel (%p877) target = $region44
        $region43: #{tpu_custom_call.1} parent=31 // pred_region
          %s880 = smul.u32 32, %s26
          %s882 = ssub.s32 2048, 2048
          %883 = vsyncadd %s868, %s882
          %s884 = smul.addr %s880, 64
          %s885 = scalar_lea.hbm %s3, %s884
          %s886 = sshll.u32 %s871, 4
          %s887 = int_to_ptr.vmem [resolvable:$true] %s886
          %892 = dma.vmem_to_hbm [thread:$0]  %s887, 2048, %s885, %s868, 64, 64, 4
        $region44: #{tpu_custom_call.1} parent=31 // pred_fallthru
          _
        // Predicated region
        $region45: #{tpu_custom_call.1} parent=31 // pred_check
          %p893 = pneg %p138
        $region46: #{tpu_custom_call.1} parent=31 // pred_check_branch
          %895 = sbr.rel (%p893) target = $region48
        $region47: #{tpu_custom_call.1} parent=31 // pred_region
          %s896 = smul.u32 32, %s26
          %s898 = ssub.s32 4096, 4096
          %899 = vsyncadd %s873, %s898
          %s900 = smul.addr %s896, 128
          %s901 = scalar_lea.hbm %s4, %s900
          %s902 = sshll.u32 %s876, 4
          %s903 = int_to_ptr.vmem [resolvable:$true] %s902
          %908 = dma.vmem_to_hbm [thread:$0]  %s903, 4096, %s901, %s873, 128, 128, 8
        $region48: #{tpu_custom_call.1} parent=31 // pred_fallthru
          _
      $region32: #{tpu_custom_call.1} parent=5 // pred_fallthru
        _
      %p909 = scmp.le.s32.totalorder 2, %s21
      // Predicated region
      $region49: #{tpu_custom_call.1} parent=5 // pred_check
        %p910 = pneg %p909
      $region50: #{tpu_custom_call.1} parent=5 // pred_check_branch
        %912 = sbr.rel (%p910) target = $region52
      $region51: #{tpu_custom_call.1} parent=5 // pred_region
        %s913 = ssub.s32 %s21, 2
        // Predicated region
        $region53: #{tpu_custom_call.1} parent=51 // pred_check
          %p914 = pneg %p118
        $region54: #{tpu_custom_call.1} parent=51 // pred_check_branch
          %916 = sbr.rel (%p914) target = $region56
        $region55: #{tpu_custom_call.1} parent=51 // pred_region
          %s917 = sand.u32 %s103, 1
          %s918 = scalar_lea.sflag [#allocation4], %s917
          %s919 = sand.u32 %s103, 1
          %s920 = smul.addr %s919, 128
          %s921 = scalar_lea.vmem [#allocation7], %s920
          %922 = dma.done %s918, 2048
        $region56: #{tpu_custom_call.1} parent=51 // pred_fallthru
          _
        // Predicated region
        $region57: #{tpu_custom_call.1} parent=51 // pred_check
          %p923 = pneg %p144
        $region58: #{tpu_custom_call.1} parent=51 // pred_check_branch
          %925 = sbr.rel (%p923) target = $region60
        $region59: #{tpu_custom_call.1} parent=51 // pred_region
          %s926 = sand.u32 %s129, 1
          %s927 = scalar_lea.sflag [#allocation9], %s926
          %s928 = sand.u32 %s129, 1
          %s929 = smul.addr %s928, 256
          %s930 = scalar_lea.vmem [#allocation8], %s929
          %931 = dma.done %s927, 4096
        $region60: #{tpu_custom_call.1} parent=51 // pred_fallthru
          _
      $region52: #{tpu_custom_call.1} parent=5 // pred_fallthru
        _
    $region6: #{tpu_custom_call.1} parent=1 // loop_footer
      %s25 = sadd.s32 1, %s21
    $region7: #{tpu_custom_call.1} parent=1 // loop_footer_branch
      %20 = sbr.rel target = $region3
    $region8: #{tpu_custom_call.1} parent=1 // loop_exit
      _
    %932 = vsyncpa [#allocation3], 1
    %s933 = scalar_lea.sflag [#allocation3], 1
    %934 = vsyncpa %s933, 1
    %935 = vsyncpa [#allocation6], 1
    %936 = vsyncpa [#allocation4], 1
    %s937 = scalar_lea.sflag [#allocation4], 1
    %938 = vsyncpa %s937, 1
    %939 = vsyncpa [#allocation9], 1
    %s940 = scalar_lea.sflag [#allocation9], 1
    %941 = vsyncpa %s940, 1

</llo_original>
